<compile_context>
chip_gen: v7x
topology: tpu7x:2x2x1
jax: 0.10.0
libtpu: 0.0.40
codegen_flags: <defaults>
</compile_context>

<pallas_src>
import jax
import jax.numpy as jnp
from jax.experimental import pallas as pl
from jax.experimental.pallas import tpu as pltpu

PACK = 8  # batch rows packed per matmul row (fills the 128-wide lane axis: 8 * out_dim(16) = 128)


def _prop_linear_kernel(z_ref, w_ref, b_ref, o_ref):
    # out = z @ W + b   (single MXU matmul, f32 accumulate, bias row-broadcast)
    acc = jnp.dot(z_ref[...], w_ref[...], preferred_element_type=jnp.float32)
    o_ref[...] = (acc + b_ref[...]).astype(o_ref.dtype)


def prepare_prop_linear_params(w1, b1, w2, b2, dtype=jnp.float32):
    """Fold the two linears into one matmul and build lane-dense packed layouts.

    Call once at parameter-load time so the per-call wrapper does no HBM work
    beyond the kernel itself.
    """
    w12 = jnp.dot(w1, w2, preferred_element_type=jnp.float32).astype(dtype)          # (in, out)
    b_eff = (jnp.dot(b1, w2, preferred_element_type=jnp.float32) + b2).astype(dtype)  # (1, out)
    b_eff = b_eff.reshape(1, -1)
    # Block-diagonal packing: PACK batch rows per matmul row -> lane-dense output stores.
    w_bd = jnp.kron(jnp.eye(PACK, dtype=dtype), w12)     # (PACK*in, PACK*out)
    b_bd = jnp.tile(b_eff, (1, PACK))                    # (1, PACK*out)
    return {"w12": w12, "b_eff": b_eff, "w_bd": w_bd, "b_bd": b_bd}


def prop_linear_apply(z, params, *, batch_tile=16384):
    """Fused propLinear forward.  z: (B, input_dim) -> (B, output_dim)."""
    B, in_dim = z.shape
    out_dim = params["w12"].shape[1]

    if B % PACK == 0:
        # Lane-dense packed layout (free metadata reshapes on contiguous rows).
        zp = z.reshape(B // PACK, PACK * in_dim)
        w, b = params["w_bd"], params["b_bd"]
        rows, k, n = B // PACK, PACK * in_dim, PACK * out_dim
        tile = max(batch_tile // PACK, 8)
    else:
        # Fallback (lane-sparse) when B is not a multiple of PACK.
        zp, w, b = z, params["w12"], params["b_eff"]
        rows, k, n = B, in_dim, out_dim
        tile = max(batch_tile, 8)

    if rows <= tile:
        # Small batch: single invocation, whole arrays in VMEM, no grid machinery.
        out = pl.pallas_call(
            _prop_linear_kernel,
            out_shape=jax.ShapeDtypeStruct((rows, n), z.dtype),
        )(zp, w, b)
    else:
        steps = pl.cdiv(rows, tile)
        if steps < 4:
            # Give the "parallel" axis >= 4 steps so v7x's two TensorCores both get work.
            tile = max(8, ((pl.cdiv(rows, 4) + 7) // 8) * 8)
            steps = pl.cdiv(rows, tile)
        out = pl.pallas_call(
            _prop_linear_kernel,
            out_shape=jax.ShapeDtypeStruct((rows, n), z.dtype),
            grid=(steps,),
            in_specs=[
                pl.BlockSpec((tile, k), lambda i: (i, 0)),   # activations stream
                pl.BlockSpec((k, n), lambda i: (0, 0)),      # weight resident
                pl.BlockSpec((1, n), lambda i: (0, 0)),      # bias resident
            ],
            out_specs=pl.BlockSpec((tile, n), lambda i: (i, 0)),
            compiler_params=pltpu.CompilerParams(
                dimension_semantics=("parallel",),
                vmem_limit_bytes=32 * 1024 * 1024,  # headroom above v5e's 16 MiB scoped default
            ),
        )(zp, w, b)

    return out.reshape(B, out_dim)


def prop_linear(z, w1, b1, w2, b2, *, batch_tile=16384):
    """Convenience wrapper; real deployments should call prepare_prop_linear_params once."""
    params = prepare_prop_linear_params(w1, b1, w2, b2, dtype=z.dtype)
    return prop_linear_apply(z, params, batch_tile=batch_tile)


if __name__ == "__main__":
    # Shapes consistent with the module: input_dim=32, hidden_dim=64, output_dim=16.
    input_dim, hidden_dim, output_dim = 32, 64, 16

    key = jax.random.PRNGKey(0)
    kz, kw1, kb1, kw2, kb2 = jax.random.split(key, 5)

    # Deterministic synthetic parameters (nn.Linear-style uniform init bounds).
    lim1 = 1.0 / jnp.sqrt(input_dim)
    w1 = jax.random.uniform(kw1, (input_dim, hidden_dim), jnp.float32, -lim1, lim1)
    b1 = jax.random.uniform(kb1, (1, hidden_dim), jnp.float32, -lim1, lim1)
    lim2 = 1.0 / jnp.sqrt(hidden_dim)
    w2 = jax.random.uniform(kw2, (hidden_dim, output_dim), jnp.float32, -lim2, lim2)
    b2 = jax.random.uniform(kb2, (1, output_dim), jnp.float32, -lim2, lim2)

    # Fold parameters once (load-time folding).
    params = prepare_prop_linear_params(w1, b1, w2, b2)

    def ref_fn(x):
        return (x @ w1 + b1) @ w2 + b2

    def check(batch, batch_tile):
        zz = jax.random.normal(jax.random.PRNGKey(batch), (batch, input_dim), dtype=jnp.float32)
        out = prop_linear_apply(zz, params, batch_tile=batch_tile)
        jax.block_until_ready(out)
        assert out.shape == (batch, output_dim)
        assert jnp.allclose(out, ref_fn(zz), atol=1e-4, rtol=1e-4)

    # 1) Small batch: packed, no-grid path.
    check(8, 16384)
    # 2) Large batch: packed, grid path with >= 4 steps (megacore-friendly), even blocks.
    check(4096, 1024)
    # 3) Large batch: packed, grid path with a partial (masked) last block, no padding copies.
    check(3280, 1024)
    # 4) Batch not a multiple of PACK: lane-sparse fallback path.
    check(50, 16384)

    print("KERNEL_OK")
</pallas_src>

<mosaic_0001>
module attributes {stable_mosaic.version = 11 : i64} {
  func.func @_prop_linear_kernel(%arg0: memref<1x256xf32, #tpu.memory_space<vmem>>, %arg1: memref<256x128xf32, #tpu.memory_space<vmem>>, %arg2: memref<1x128xf32, #tpu.memory_space<vmem>>, %arg3: memref<1x128xf32, #tpu.memory_space<vmem>>) attributes {dimension_semantics = [], scalar_prefetch = 0 : i64, scratch_operands = 0 : i64, tpu.core_type = #tpu.core_type<tc>} {
    %c0 = arith.constant 0 : index
    %c0_0 = arith.constant 0 : index
    %0 = vector.load %arg0[%c0, %c0_0] : memref<1x256xf32, #tpu.memory_space<vmem>>, vector<1x256xf32>
    %c0_1 = arith.constant 0 : index
    %c0_2 = arith.constant 0 : index
    %1 = vector.load %arg1[%c0_1, %c0_2] : memref<256x128xf32, #tpu.memory_space<vmem>>, vector<256x128xf32>
    %cst = arith.constant dense<0.000000e+00> : vector<1x128xf32>
    %2 = tpu.matmul %0, %1, %cst {dimension_numbers = #tpu.dot_dimension_numbers<[1], [0], [0], [1], [0, 0, 1, 1], [], []>} : vector<1x256xf32>, vector<256x128xf32>, vector<1x128xf32> -> vector<1x128xf32>
    %c0_3 = arith.constant 0 : index
    %c0_4 = arith.constant 0 : index
    %3 = vector.load %arg2[%c0_3, %c0_4] : memref<1x128xf32, #tpu.memory_space<vmem>>, vector<1x128xf32>
    %4 = arith.addf %2, %3 : vector<1x128xf32>
    %c0_5 = arith.constant 0 : index
    %c0_6 = arith.constant 0 : index
    %5 = vector.load %arg3[%c0_5, %c0_6] : memref<1x128xf32, #tpu.memory_space<vmem>>, vector<1x128xf32>
    tpu.vector_store %arg3[%c0_5, %c0_6], %4 {strides = array<i32>} : memref<1x128xf32, #tpu.memory_space<vmem>>, vector<1x128xf32>,
    return
  }
}

</mosaic_0001>

<llo_original>
// kernel: tpu_custom_call.1
$region0: #{tpu_custom_call.1}
  #allocation0 [shape = 'u32[]', space=smem, size = 0x4, offset = 0x4, fixed_abs, tag = 'smem constant byte address 0x4 - core index']
  #allocation1 [shape = 'u32[144,128]{1,0:T(1,128)}', space=vmem, size = 0x12000, scoped, tag = 'internal scratch']
  %s0 = inlined_call_operand.hbm [shape: f32[1,256], index: 0, kind: input, shape index: {}]
  %s1 = inlined_call_operand.hbm [shape: f32[256,128], index: 1, kind: input, shape index: {}]
  %s2 = inlined_call_operand.vmem [shape: f32[1,128], index: 2, kind: input, shape index: {}]
  %s3 = inlined_call_operand.hbm [shape: f32[1,128], index: 3, kind: output, shape index: {}]
  %s4 = sld [smem:[#allocation0]]
  $region30: #{tpu_custom_call.1} parent=0
    _
  %s6 = ssub.s32 1, %s4
  %s7 = scalar_select 0, %s6, %s4
  $region1: #{tpu_custom_call.1} parent=0
    #allocation2 [shape = 'u8[1024]{0}', space=vmem, size = 0x400, scoped, tag = 'input window, operand 0, single buffered']
    #allocation3 [shape = 's32[1]{0}', space=sflag, size = 0x4, scoped, tag = 'scoped memory for tpu_custom_call.1']
    #allocation4 [shape = 's32[1]{0}', space=sflag, size = 0x4, scoped, tag = 'scoped memory for tpu_custom_call.1']
    #allocation5 [shape = 'u8[131072]{0}', space=vmem, size = 0x20000, scoped, tag = 'input window, operand 1, single buffered']
    #allocation6 [shape = 's32[1]{0}', space=sflag, size = 0x4, scoped, tag = 'scoped memory for tpu_custom_call.1']
    #allocation7 [shape = 'u8[512]{0}', space=vmem, size = 0x400, scoped, tag = 'output window, operand 0, single buffered']
    %8 = vsyncpa [#allocation3], 0
    %9 = vsyncpa [#allocation6], 0
    %10 = vsyncpa [#allocation4], 0
    // Predicated region
    $region2: #{tpu_custom_call.1} parent=1 // pred_check
      _
    $region3: #{tpu_custom_call.1} parent=1 // pred_check_branch
      %12 = sbr.rel (0) target = $region5
    $region4: #{tpu_custom_call.1} parent=1 // pred_region
      %s14 = ssub.s32 32, 32
      %15 = vsyncadd [#allocation3], %s14
      %s17 = sshll.u32 [#allocation2], 4
      %s18 = int_to_ptr.vmem [resolvable:$true] %s17
      %20 = dma.hbm_to_vmem [thread:$0]  %s0, 32, %s18, [#allocation3]
    $region5: #{tpu_custom_call.1} parent=1 // pred_fallthru
      _
    // Predicated region
    $region6: #{tpu_custom_call.1} parent=1 // pred_check
      _
    $region7: #{tpu_custom_call.1} parent=1 // pred_check_branch
      %22 = sbr.rel (0) target = $region9
    $region8: #{tpu_custom_call.1} parent=1 // pred_region
      %s24 = ssub.s32 4096, 4096
      %25 = vsyncadd [#allocation6], %s24
      %s26 = sshll.u32 [#allocation5], 4
      %s27 = int_to_ptr.vmem [resolvable:$true] %s26
      %32 = dma.hbm_to_vmem [thread:$0]  %s1, 4096, %s27, [#allocation6], 128, 128, 8
    $region9: #{tpu_custom_call.1} parent=1 // pred_fallthru
      _
    // Predicated region
    $region10: #{tpu_custom_call.1} parent=1 // pred_check
      _
    $region11: #{tpu_custom_call.1} parent=1 // pred_check_branch
      %34 = sbr.rel (0) target = $region13
    $region12: #{tpu_custom_call.1} parent=1 // pred_region
      _
    $region13: #{tpu_custom_call.1} parent=1 // pred_fallthru
      _
    // Predicated region
    $region14: #{tpu_custom_call.1} parent=1 // pred_check
      _
    $region15: #{tpu_custom_call.1} parent=1 // pred_check_branch
      %36 = sbr.rel (0) target = $region17
    $region16: #{tpu_custom_call.1} parent=1 // pred_region
      %37 = dma.done [#allocation3], 32
    $region17: #{tpu_custom_call.1} parent=1 // pred_fallthru
      _
    // Predicated region
    $region18: #{tpu_custom_call.1} parent=1 // pred_check
      _
    $region19: #{tpu_custom_call.1} parent=1 // pred_check_branch
      %39 = sbr.rel (0) target = $region21
    $region20: #{tpu_custom_call.1} parent=1 // pred_region
      %40 = dma.done [#allocation6], 4096
    $region21: #{tpu_custom_call.1} parent=1 // pred_fallthru
      _
    %v41 = vld [vmem:[#allocation2] sm:$0x3]
    %v42 = vld [vmem:[#allocation5] sm:$0xff]
    %v43 = vld [vmem:[#allocation5 + $0x8] sm:$0xff]
    %v44 = vld [vmem:[#allocation5 + $0x10] sm:$0xff]
    %v45 = vld [vmem:[#allocation5 + $0x18] sm:$0xff]
    %v46 = vld [vmem:[#allocation5 + $0x20] sm:$0xff]
    %v47 = vld [vmem:[#allocation5 + $0x28] sm:$0xff]
    %v48 = vld [vmem:[#allocation5 + $0x30] sm:$0xff]
    %v49 = vld [vmem:[#allocation5 + $0x38] sm:$0xff]
    %v50 = vld [vmem:[#allocation5 + $0x40] sm:$0xff]
    %v51 = vld [vmem:[#allocation5 + $0x48] sm:$0xff]
    %v52 = vld [vmem:[#allocation5 + $0x50] sm:$0xff]
    %v53 = vld [vmem:[#allocation5 + $0x58] sm:$0xff]
    %v54 = vld [vmem:[#allocation5 + $0x60] sm:$0xff]
    %v55 = vld [vmem:[#allocation5 + $0x68] sm:$0xff]
    %v56 = vld [vmem:[#allocation5 + $0x70] sm:$0xff]
    %v57 = vld [vmem:[#allocation5 + $0x78] sm:$0xff]
    %v58 = vld [vmem:[#allocation5 + $0x80] sm:$0xff]
    %v59 = vld [vmem:[#allocation5 + $0x88] sm:$0xff]
    %v60 = vld [vmem:[#allocation5 + $0x90] sm:$0xff]
    %v61 = vld [vmem:[#allocation5 + $0x98] sm:$0xff]
    %v62 = vld [vmem:[#allocation5 + $0xa0] sm:$0xff]
    %v63 = vld [vmem:[#allocation5 + $0xa8] sm:$0xff]
    %v64 = vld [vmem:[#allocation5 + $0xb0] sm:$0xff]
    %v65 = vld [vmem:[#allocation5 + $0xb8] sm:$0xff]
    %v66 = vld [vmem:[#allocation5 + $0xc0] sm:$0xff]
    %v67 = vld [vmem:[#allocation5 + $0xc8] sm:$0xff]
    %v68 = vld [vmem:[#allocation5 + $0xd0] sm:$0xff]
    %v69 = vld [vmem:[#allocation5 + $0xd8] sm:$0xff]
    %v70 = vld [vmem:[#allocation5 + $0xe0] sm:$0xff]
    %v71 = vld [vmem:[#allocation5 + $0xe8] sm:$0xff]
    %v72 = vld [vmem:[#allocation5 + $0xf0] sm:$0xff]
    %v73 = vld [vmem:[#allocation5 + $0xf8] sm:$0xff]
    %v74 = vld [vmem:[%s2] sm:$0x1]
    %v76 = vlaneseq
    %v77 = vshrl.u32 %v76, 7
    %v78 = vsub.s32 0, %v77
    %v79 = vrot.slane %v41, %v78
    %v80 = vlaneseq
    %v81 = vshrl.u32 %v80, 7
    %v82 = vsub.s32 1, %v81
    %v83 = vrot.slane %v41, %v82
    %86 = vmatprep.subr.mxu0 0.0
    %87 = vmatpush1.msra.mxu0 %v42
    %88 = vmatprep.subr.mxu0 0.0
    %89 = vmatpush1.msra.mxu0 %v43
    %90 = vmatprep.subr.mxu0 0.0
    %91 = vmatpush1.msra.mxu0 %v44
    %92 = vmatprep.subr.mxu0 0.0
    %93 = vmatpush1.msra.mxu0 %v45
    %94 = vmatprep.subr.mxu0 0.0
    %95 = vmatpush1.msra.mxu0 %v46
    %96 = vmatprep.subr.mxu0 0.0
    %97 = vmatpush1.msra.mxu0 %v47
    %98 = vmatprep.subr.mxu0 0.0
    %99 = vmatpush1.msra.mxu0 %v48
    %100 = vmatprep.subr.mxu0 0.0
    %101 = vmatpush1.msra.mxu0 %v49
    %102 = vmatprep.subr.mxu0 0.0
    %103 = vmatpush1.msra.mxu0 %v50
    %104 = vmatprep.subr.mxu0 0.0
    %105 = vmatpush1.msra.mxu0 %v51
    %106 = vmatprep.subr.mxu0 0.0
    %107 = vmatpush1.msra.mxu0 %v52
    %108 = vmatprep.subr.mxu0 0.0
    %109 = vmatpush1.msra.mxu0 %v53
    %110 = vmatprep.subr.mxu0 0.0
    %111 = vmatpush1.msra.mxu0 %v54
    %112 = vmatprep.subr.mxu0 0.0
    %113 = vmatpush1.msra.mxu0 %v55
    %114 = vmatprep.subr.mxu0 0.0
    %115 = vmatpush1.msra.mxu0 %v56
    %116 = vmatprep.subr.mxu0 0.0
    %117 = vmatpush1.msra.mxu0 %v57
    %118 = vmatprep.subr.mxu0 0.0
    %119 = vmatpush1.msra.mxu0 %v58
    %120 = vmatprep.subr.mxu0 0.0
    %121 = vmatpush1.msra.mxu0 %v59
    %122 = vmatprep.subr.mxu0 0.0
    %123 = vmatpush1.msra.mxu0 %v60
    %124 = vmatprep.subr.mxu0 0.0
    %125 = vmatpush1.msra.mxu0 %v61
    %126 = vmatprep.subr.mxu0 0.0
    %127 = vmatpush1.msra.mxu0 %v62
    %128 = vmatprep.subr.mxu0 0.0
    %129 = vmatpush1.msra.mxu0 %v63
    %130 = vmatprep.subr.mxu0 0.0
    %131 = vmatpush1.msra.mxu0 %v64
    %132 = vmatprep.subr.mxu0 0.0
    %133 = vmatpush1.msra.mxu0 %v65
    %134 = vmatprep.subr.mxu0 0.0
    %135 = vmatpush1.msra.mxu0 %v66
    %136 = vmatprep.subr.mxu0 0.0
    %137 = vmatpush1.msra.mxu0 %v67
    %138 = vmatprep.subr.mxu0 0.0
    %139 = vmatpush1.msra.mxu0 %v68
    %140 = vmatprep.subr.mxu0 0.0
    %141 = vmatpush1.msra.mxu0 %v69
    %142 = vmatprep.subr.mxu0 0.0
    %143 = vmatpush1.msra.mxu0 %v70
    %144 = vmatprep.subr.mxu0 0.0
    %145 = vmatpush1.msra.mxu0 %v71
    %146 = vmatprep.subr.mxu0 0.0
    %147 = vmatpush1.msra.mxu0 %v72
    %148 = vmatprep.subr.mxu0 0.0
    %149 = vmatpush1.msra.mxu0 %v73
    %150 = vmatprep.mubr.f32.mxu0 %v83
    %151 = vmatmul.mubr.f32.gmra.mrb[0].mxu0 %v79
    %v152 = vpop.f32.mrb[0].mxu0
    %v153 = vadd.f32 %v74, %v152
    %v154 = vpop.f32.mrb[0].mxu0
    %155 = vdwg.mxu0
    %156 = vst [vmem:[#allocation7] sm:$0x1] %v153
    // Predicated region
    $region22: #{tpu_custom_call.1} parent=1 // pred_check
      _
    $region23: #{tpu_custom_call.1} parent=1 // pred_check_branch
      %158 = sbr.rel (0) target = $region25
    $region24: #{tpu_custom_call.1} parent=1 // pred_region
      %s160 = ssub.s32 16, 16
      %161 = vsyncadd [#allocation4], %s160
      %s163 = sshll.u32 [#allocation7], 4
      %s164 = int_to_ptr.vmem [resolvable:$true] %s163
      %166 = dma.vmem_to_hbm [thread:$0]  %s164, 16, %s3, [#allocation4]
    $region25: #{tpu_custom_call.1} parent=1 // pred_fallthru
      _
    // Predicated region
    $region26: #{tpu_custom_call.1} parent=1 // pred_check
      _
    $region27: #{tpu_custom_call.1} parent=1 // pred_check_branch
      %168 = sbr.rel (0) target = $region29
    $region28: #{tpu_custom_call.1} parent=1 // pred_region
      %169 = dma.done [#allocation4], 16
    $region29: #{tpu_custom_call.1} parent=1 // pred_fallthru
      _
    %170 = vsyncpa [#allocation3], 1
    %171 = vsyncpa [#allocation6], 1
    %172 = vsyncpa [#allocation4], 1

</llo_original>
